<compile_context>
chip_gen: v7x
topology: tpu7x:2x2x1
jax: 0.10.0
libtpu: 0.0.40
codegen_flags: <defaults>
</compile_context>

<pallas_src>
import jax
import jax.numpy as jnp
from jax.experimental import pallas as pl
from jax.experimental.pallas import tpu as pltpu

_SUBLANE = 8


def _cdiv(a, b):
    return -(-a // b)


def _round_up(x, m):
    return (x + m - 1) // m * m


def _choose_batch_tile(B, block_b):
    # Multiple of 8 rows; when possible give the grid >= 2 steps (v7x dual-TC
    # sharding of the "parallel" axis + software pipelining everywhere).
    tb = min(block_b, _round_up(_cdiv(B, 2), _SUBLANE))
    return max(_SUBLANE, tb)


def _encoder_kernel(x_ref, w1_ref, b1_ref, w2_ref, b2_ref, o_ref):
    # h = relu(x @ W1 + b1)   -- MXU matmul, f32 accumulation
    h = jnp.dot(x_ref[...], w1_ref[...], preferred_element_type=jnp.float32)
    h = jnp.maximum(h + b1_ref[...], 0.0)
    # out = relu(h @ W2 + b2)
    h = h.astype(w2_ref.dtype)  # no-op for f32; single in-kernel cast on bf16 path
    out = jnp.dot(h, w2_ref[...], preferred_element_type=jnp.float32)
    o_ref[...] = jnp.maximum(out + b2_ref[...], 0.0).astype(o_ref.dtype)


def custom_encoder_forward(x, w1, b1, w2, b2, *, block_b=512,
                           compute_dtype=None, max_vmem_bytes=None):
    """Forward pass of CustomEncoder.

    x:  (B, obs_dim) float32
    w1: (obs_dim, F)  -- PyTorch fc1.weight.T
    b1: (F,)
    w2: (F, F)        -- PyTorch fc2.weight.T
    b2: (F,)
    Returns: (B, F) in x.dtype
    """
    B, K = x.shape
    assert w1.shape[0] == K
    F = w1.shape[1]
    assert w2.shape == (F, F) and b1.shape == (F,) and b2.shape == (F,)

    out_dtype = x.dtype
    cdt = jnp.dtype(compute_dtype) if compute_dtype is not None else jnp.dtype(x.dtype)

    # bf16 path: pre-cast in the wrapper so the DMA'd bytes are already halved
    # (in-kernel casts would still stream f32 from HBM).  Biases stay f32 and
    # are added to the f32 MXU accumulator.
    if cdt != x.dtype:
        x = x.astype(cdt)
    if cdt != w1.dtype:
        w1 = w1.astype(cdt)
        w2 = w2.astype(cdt)
    b1_2d = b1.reshape(1, F).astype(jnp.float32)
    b2_2d = b2.reshape(1, F).astype(jnp.float32)

    TB = _choose_batch_tile(B, block_b)
    grid = (_cdiv(B, TB),)  # partial last tile handled by Pallas edge masking

    itemsize_c = jnp.dtype(cdt).itemsize
    # VMEM footprint: single-buffered resident weights/biases + double-buffered
    # x-in / out tiles (+ headroom for compiler scratch).
    resident = (K * F + F * F) * itemsize_c + 2 * F * 4
    streamed = 2 * TB * (K * itemsize_c + F * jnp.dtype(out_dtype).itemsize)
    if max_vmem_bytes is None:
        vmem_limit = max(2 * (resident + streamed) + (2 << 20), 32 << 20)
        vmem_limit = min(vmem_limit, 100 << 20)  # see TODO above for v7x large-F
    else:
        vmem_limit = max_vmem_bytes

    flops = 2 * B * F * (K + F)
    bytes_accessed = (
        B * K * itemsize_c                     # x
        + (K * F + F * F) * itemsize_c         # w1, w2
        + 2 * F * 4                            # biases
        + B * F * jnp.dtype(out_dtype).itemsize  # out
    )

    out = pl.pallas_call(
        _encoder_kernel,
        out_shape=jax.ShapeDtypeStruct((B, F), out_dtype),
        grid_spec=pltpu.PrefetchScalarGridSpec(
            num_scalar_prefetch=0,
            grid=grid,
            in_specs=[
                # x tile follows the batch grid index; last dim == full K
                # (no HBM padding of x).
                pl.BlockSpec((TB, K), lambda i: (i, 0)),
                # Weights / biases: constant index_map -> VMEM-resident and
                # single-buffered (no point double-buffering a constant block).
                pl.BlockSpec((K, F), lambda i: (0, 0),
                             pipeline_mode=pl.Buffered(1)),
                pl.BlockSpec((1, F), lambda i: (0, 0),
                             pipeline_mode=pl.Buffered(1)),
                pl.BlockSpec((F, F), lambda i: (0, 0),
                             pipeline_mode=pl.Buffered(1)),
                pl.BlockSpec((1, F), lambda i: (0, 0),
                             pipeline_mode=pl.Buffered(1)),
            ],
            # Output block last dim == full F: masked vst for small F beats the
            # padded-write + post-kernel-slice (two extra HBM passes) scheme.
            out_specs=pl.BlockSpec((TB, F), lambda i: (i, 0)),
        ),
        compiler_params=pltpu.CompilerParams(
            dimension_semantics=("parallel",),   # megacore / v7x dual-TC
            vmem_limit_bytes=int(vmem_limit),
        ),
        cost_estimate=pl.CostEstimate(
            flops=flops, transcendentals=0, bytes_accessed=bytes_accessed),
    )(x, w1, b1_2d, w2, b2_2d)

    return out


def _reference(x, w1, b1, w2, b2):
    h = jnp.maximum(x @ w1 + b1[None, :], 0.0)
    return jnp.maximum(h @ w2 + b2[None, :], 0.0)


if __name__ == "__main__":
    # Small shapes consistent with the module:
    # observation_shape = (obs_dim,), feature_size = F
    batch, obs_dim, feature_size = 8, 16, 32

    key = jax.random.PRNGKey(0)
    k_x, k_w1, k_b1, k_w2, k_b2 = jax.random.split(key, 5)

    x = jax.random.normal(k_x, (batch, obs_dim), dtype=jnp.float32)

    # PyTorch fc.weight is (out, in); we store the transposed (in, out) form.
    w1 = jax.random.normal(k_w1, (obs_dim, feature_size), dtype=jnp.float32) * 0.1
    b1 = jax.random.normal(k_b1, (feature_size,), dtype=jnp.float32) * 0.1
    w2 = jax.random.normal(k_w2, (feature_size, feature_size), dtype=jnp.float32) * 0.1
    b2 = jax.random.normal(k_b2, (feature_size,), dtype=jnp.float32) * 0.1

    out = custom_encoder_forward(x, w1, b1, w2, b2)
    out = jax.block_until_ready(out)

    ref = _reference(x, w1, b1, w2, b2)
    assert out.shape == (batch, feature_size)
    assert jnp.allclose(out, ref, atol=1e-5, rtol=1e-5)

    print("KERNEL_OK")
</pallas_src>

<mosaic_0001>
module attributes {stable_mosaic.version = 11 : i64} {
  func.func @_encoder_kernel(%arg0: i32, %arg1: memref<8x16xf32, #tpu.memory_space<vmem>>, %arg2: memref<16x32xf32, #tpu.memory_space<vmem>>, %arg3: memref<1x32xf32, #tpu.memory_space<vmem>>, %arg4: memref<32x32xf32, #tpu.memory_space<vmem>>, %arg5: memref<1x32xf32, #tpu.memory_space<vmem>>, %arg6: memref<8x32xf32, #tpu.memory_space<vmem>>) attributes {dimension_semantics = [#tpu.dimension_semantics<parallel>], iteration_bounds = array<i64: 1>, scalar_prefetch = 0 : i64, scratch_operands = 0 : i64, tpu.core_type = #tpu.core_type<tc>, window_params = [{transform_indices = @transform_0, window_bounds = array<i64: 8, 16>}, {pipeline_mode = #tpu.pipeline_mode<synchronous>, transform_indices = @transform_1, window_bounds = array<i64: 16, 32>}, {pipeline_mode = #tpu.pipeline_mode<synchronous>, transform_indices = @transform_2, window_bounds = array<i64: 1, 32>}, {pipeline_mode = #tpu.pipeline_mode<synchronous>, transform_indices = @transform_3, window_bounds = array<i64: 32, 32>}, {pipeline_mode = #tpu.pipeline_mode<synchronous>, transform_indices = @transform_4, window_bounds = array<i64: 1, 32>}, {transform_indices = @transform_5, window_bounds = array<i64: 8, 32>}]} {
    %c0 = arith.constant 0 : index
    %c0_0 = arith.constant 0 : index
    %0 = vector.load %arg1[%c0, %c0_0] : memref<8x16xf32, #tpu.memory_space<vmem>>, vector<8x16xf32>
    %c0_1 = arith.constant 0 : index
    %c0_2 = arith.constant 0 : index
    %1 = vector.load %arg2[%c0_1, %c0_2] : memref<16x32xf32, #tpu.memory_space<vmem>>, vector<16x32xf32>
    %cst = arith.constant dense<0.000000e+00> : vector<8x32xf32>
    %2 = tpu.matmul %0, %1, %cst {dimension_numbers = #tpu.dot_dimension_numbers<[1], [0], [0], [1], [0, 0, 1, 1], [], []>} : vector<8x16xf32>, vector<16x32xf32>, vector<8x32xf32> -> vector<8x32xf32>
    %c0_3 = arith.constant 0 : index
    %c0_4 = arith.constant 0 : index
    %3 = vector.load %arg3[%c0_3, %c0_4] : memref<1x32xf32, #tpu.memory_space<vmem>>, vector<1x32xf32>
    %4 = vector.broadcast %3 : vector<1x32xf32> to vector<8x32xf32>
    %5 = arith.addf %2, %4 : vector<8x32xf32>
    %cst_5 = arith.constant 0.000000e+00 : f32
    %6 = vector.broadcast %cst_5 : f32 to vector<8x32xf32>
    %7 = arith.maximumf %5, %6 : vector<8x32xf32>
    %c0_6 = arith.constant 0 : index
    %c0_7 = arith.constant 0 : index
    %8 = vector.load %arg4[%c0_6, %c0_7] : memref<32x32xf32, #tpu.memory_space<vmem>>, vector<32x32xf32>
    %cst_8 = arith.constant dense<0.000000e+00> : vector<8x32xf32>
    %9 = tpu.matmul %7, %8, %cst_8 {dimension_numbers = #tpu.dot_dimension_numbers<[1], [0], [0], [1], [0, 0, 1, 1], [], []>} : vector<8x32xf32>, vector<32x32xf32>, vector<8x32xf32> -> vector<8x32xf32>
    %c0_9 = arith.constant 0 : index
    %c0_10 = arith.constant 0 : index
    %10 = vector.load %arg5[%c0_9, %c0_10] : memref<1x32xf32, #tpu.memory_space<vmem>>, vector<1x32xf32>
    %11 = vector.broadcast %10 : vector<1x32xf32> to vector<8x32xf32>
    %12 = arith.addf %9, %11 : vector<8x32xf32>
    %cst_11 = arith.constant 0.000000e+00 : f32
    %13 = vector.broadcast %cst_11 : f32 to vector<8x32xf32>
    %14 = arith.maximumf %12, %13 : vector<8x32xf32>
    %c0_12 = arith.constant 0 : index
    %c0_13 = arith.constant 0 : index
    %15 = vector.load %arg6[%c0_12, %c0_13] : memref<8x32xf32, #tpu.memory_space<vmem>>, vector<8x32xf32>
    tpu.vector_store %arg6[%c0_12, %c0_13], %14 {strides = array<i32>} : memref<8x32xf32, #tpu.memory_space<vmem>>, vector<8x32xf32>,
    return
  }
  func.func @transform_0(%arg0: i32) -> (i32, i32) {
    %c0_i32 = arith.constant 0 : i32
    %c0_i32_0 = arith.constant 0 : i32
    return %arg0, %c0_i32 : i32, i32
  }
  func.func @transform_1(%arg0: i32) -> (i32, i32) {
    %c0_i32 = arith.constant 0 : i32
    %c0_i32_0 = arith.constant 0 : i32
    %c0_i32_1 = arith.constant 0 : i32
    return %c0_i32, %c0_i32_0 : i32, i32
  }
  func.func @transform_2(%arg0: i32) -> (i32, i32) {
    %c0_i32 = arith.constant 0 : i32
    %c0_i32_0 = arith.constant 0 : i32
    %c0_i32_1 = arith.constant 0 : i32
    return %c0_i32, %c0_i32_0 : i32, i32
  }
  func.func @transform_3(%arg0: i32) -> (i32, i32) {
    %c0_i32 = arith.constant 0 : i32
    %c0_i32_0 = arith.constant 0 : i32
    %c0_i32_1 = arith.constant 0 : i32
    return %c0_i32, %c0_i32_0 : i32, i32
  }
  func.func @transform_4(%arg0: i32) -> (i32, i32) {
    %c0_i32 = arith.constant 0 : i32
    %c0_i32_0 = arith.constant 0 : i32
    %c0_i32_1 = arith.constant 0 : i32
    return %c0_i32, %c0_i32_0 : i32, i32
  }
  func.func @transform_5(%arg0: i32) -> (i32, i32) {
    %c0_i32 = arith.constant 0 : i32
    %c0_i32_0 = arith.constant 0 : i32
    return %arg0, %c0_i32 : i32, i32
  }
}

</mosaic_0001>

<llo_original>
// kernel: tpu_custom_call.1
$region0: #{tpu_custom_call.1}
  #allocation0 [shape = 'u32[]', space=smem, size = 0x4, offset = 0x4, fixed_abs, tag = 'smem constant byte address 0x4 - core index']
  #allocation1 [shape = 'u32[144,128]{1,0:T(1,128)}', space=vmem, size = 0x12000, scoped, tag = 'internal scratch']
  %s0 = inlined_call_operand.hbm [shape: f32[8,16], index: 0, kind: input, shape index: {}]
  %s1 = inlined_call_operand.hbm [shape: f32[16,32], index: 1, kind: input, shape index: {}]
  %s2 = inlined_call_operand.vmem [shape: f32[1,32], index: 2, kind: input, shape index: {}]
  %s3 = inlined_call_operand.hbm [shape: f32[32,32], index: 3, kind: input, shape index: {}]
  %s4 = inlined_call_operand.vmem [shape: f32[1,32], index: 4, kind: input, shape index: {}]
  %s5 = inlined_call_operand.hbm [shape: f32[8,32], index: 5, kind: output, shape index: {}]
  %s6 = sld [smem:[#allocation0]]
  $region42: #{tpu_custom_call.1} parent=0
    _
  %s8 = ssub.s32 1, %s6
  %s9 = scalar_select 0, %s8, %s6
  $region1: #{tpu_custom_call.1} parent=0
    #allocation2 [shape = 'u8[4096]{0}', space=vmem, size = 0x1000, scoped, tag = 'input window, operand 0, single buffered']
    #allocation3 [shape = 's32[1]{0}', space=sflag, size = 0x4, scoped, tag = 'scoped memory for tpu_custom_call.1']
    #allocation4 [shape = 's32[1]{0}', space=sflag, size = 0x4, scoped, tag = 'scoped memory for tpu_custom_call.1']
    #allocation5 [shape = 'u8[8192]{0}', space=vmem, size = 0x2000, scoped, tag = 'input window, operand 1, single buffered']
    #allocation6 [shape = 's32[1]{0}', space=sflag, size = 0x4, scoped, tag = 'scoped memory for tpu_custom_call.1']
    #allocation7 [shape = 'u8[16384]{0}', space=vmem, size = 0x4000, scoped, tag = 'input window, operand 3, single buffered']
    #allocation8 [shape = 'u8[4096]{0}', space=vmem, size = 0x1000, scoped, tag = 'output window, operand 0, single buffered']
    %10 = vsyncpa [#allocation3], 0
    %11 = vsyncpa [#allocation6], 0
    %12 = vsyncpa [#allocation4], 0
    // Predicated region
    $region2: #{tpu_custom_call.1} parent=1 // pred_check
      _
    $region3: #{tpu_custom_call.1} parent=1 // pred_check_branch
      %14 = sbr.rel (0) target = $region5
    $region4: #{tpu_custom_call.1} parent=1 // pred_region
      %s16 = ssub.s32 128, 128
      %17 = vsyncadd [#allocation3], %s16
      %s19 = sshll.u32 [#allocation2], 4
      %s20 = int_to_ptr.vmem [resolvable:$true] %s19
      %22 = dma.hbm_to_vmem [thread:$0]  %s0, 128, %s20, [#allocation3]
    $region5: #{tpu_custom_call.1} parent=1 // pred_fallthru
      _
    // Predicated region
    $region6: #{tpu_custom_call.1} parent=1 // pred_check
      _
    $region7: #{tpu_custom_call.1} parent=1 // pred_check_branch
      %24 = sbr.rel (0) target = $region9
    $region8: #{tpu_custom_call.1} parent=1 // pred_region
      %s26 = ssub.s32 256, 256
      %27 = vsyncadd [#allocation6], %s26
      %s28 = sshll.u32 [#allocation5], 4
      %s29 = int_to_ptr.vmem [resolvable:$true] %s28
      %34 = dma.hbm_to_vmem [thread:$0]  %s1, 256, %s29, [#allocation6], 128, 128, 8
    $region9: #{tpu_custom_call.1} parent=1 // pred_fallthru
      _
    // Predicated region
    $region10: #{tpu_custom_call.1} parent=1 // pred_check
      _
    $region11: #{tpu_custom_call.1} parent=1 // pred_check_branch
      %36 = sbr.rel (0) target = $region13
    $region12: #{tpu_custom_call.1} parent=1 // pred_region
      _
    $region13: #{tpu_custom_call.1} parent=1 // pred_fallthru
      _
    // Predicated region
    $region14: #{tpu_custom_call.1} parent=1 // pred_check
      _
    $region15: #{tpu_custom_call.1} parent=1 // pred_check_branch
      %38 = sbr.rel (0) target = $region17
    $region16: #{tpu_custom_call.1} parent=1 // pred_region
      %s40 = ssub.s32 512, 512
      %41 = vsyncadd [#allocation6], %s40
      %s42 = sshll.u32 [#allocation7], 4
      %s43 = int_to_ptr.vmem [resolvable:$true] %s42
      %48 = dma.hbm_to_vmem [thread:$0]  %s3, 512, %s43, [#allocation6], 128, 128, 8
    $region17: #{tpu_custom_call.1} parent=1 // pred_fallthru
      _
    // Predicated region
    $region18: #{tpu_custom_call.1} parent=1 // pred_check
      _
    $region19: #{tpu_custom_call.1} parent=1 // pred_check_branch
      %50 = sbr.rel (0) target = $region21
    $region20: #{tpu_custom_call.1} parent=1 // pred_region
      _
    $region21: #{tpu_custom_call.1} parent=1 // pred_fallthru
      _
    // Predicated region
    $region22: #{tpu_custom_call.1} parent=1 // pred_check
      _
    $region23: #{tpu_custom_call.1} parent=1 // pred_check_branch
      %52 = sbr.rel (0) target = $region25
    $region24: #{tpu_custom_call.1} parent=1 // pred_region
      %53 = dma.done [#allocation3], 128
    $region25: #{tpu_custom_call.1} parent=1 // pred_fallthru
      _
    // Predicated region
    $region26: #{tpu_custom_call.1} parent=1 // pred_check
      _
    $region27: #{tpu_custom_call.1} parent=1 // pred_check_branch
      %55 = sbr.rel (0) target = $region29
    $region28: #{tpu_custom_call.1} parent=1 // pred_region
      %56 = dma.done [#allocation6], 256
    $region29: #{tpu_custom_call.1} parent=1 // pred_fallthru
      _
    // Predicated region
    $region30: #{tpu_custom_call.1} parent=1 // pred_check
      _
    $region31: #{tpu_custom_call.1} parent=1 // pred_check_branch
      %58 = sbr.rel (0) target = $region33
    $region32: #{tpu_custom_call.1} parent=1 // pred_region
      %59 = dma.done [#allocation6], 512
    $region33: #{tpu_custom_call.1} parent=1 // pred_fallthru
      _
    %v60 = vld [vmem:[#allocation2] sm:$0xff]
    %v61 = vld [vmem:[#allocation5] sm:$0xff]
    %v62 = vld [vmem:[#allocation5 + $0x8] sm:$0xff]
    %v63 = vld [vmem:[%s2] sm:$0x1]
    %v65 = vlaneseq
    %v66 = vshrl.u32 %v65, 7
    %v67 = vsub.s32 0, %v66
    %v68 = vrot.slane %v63, %v67
    %vm70 = vcmask 130048
    %v72 = vsel %vm70, %v60, 0
    %74 = vmatprep.subr.mxu0 0.0
    %75 = vmatpush1.msra.mxu0 %v61
    %76 = vmatprep.subr.mxu0 0.0
    %77 = vmatpush1.msra.mxu0 %v62
    %78 = vmatprep.subr.mxu0 0.0
    %79 = vmatpush1.msra.mxu0 0.0
    %80 = vmatprep.subr.mxu0 0.0
    %81 = vmatpush1.msra.mxu0 0.0
    %82 = vmatprep.subr.mxu0 0.0
    %83 = vmatpush1.msra.mxu0 0.0
    %84 = vmatprep.subr.mxu0 0.0
    %85 = vmatpush1.msra.mxu0 0.0
    %86 = vmatprep.subr.mxu0 0.0
    %87 = vmatpush1.msra.mxu0 0.0
    %88 = vmatprep.subr.mxu0 0.0
    %89 = vmatpush1.msra.mxu0 0.0
    %90 = vmatprep.subr.mxu0 0.0
    %91 = vmatpush1.msra.mxu0 0.0
    %92 = vmatprep.subr.mxu0 0.0
    %93 = vmatpush1.msra.mxu0 0.0
    %94 = vmatprep.subr.mxu0 0.0
    %95 = vmatpush1.msra.mxu0 0.0
    %96 = vmatprep.subr.mxu0 0.0
    %97 = vmatpush1.msra.mxu0 0.0
    %98 = vmatprep.subr.mxu0 0.0
    %99 = vmatpush1.msra.mxu0 0.0
    %100 = vmatprep.subr.mxu0 0.0
    %101 = vmatpush1.msra.mxu0 0.0
    %102 = vmatprep.subr.mxu0 0.0
    %103 = vmatpush1.msra.mxu0 0.0
    %104 = vmatprep.subr.mxu0 0.0
    %105 = vmatpush1.msra.mxu0 0.0
    %106 = vmatprep.subr.mxu0 0.0
    %107 = vmatpush1.msra.mxu0 0.0
    %108 = vmatprep.subr.mxu0 0.0
    %109 = vmatpush1.msra.mxu0 0.0
    %110 = vmatprep.subr.mxu0 0.0
    %111 = vmatpush1.msra.mxu0 0.0
    %112 = vmatprep.subr.mxu0 0.0
    %113 = vmatpush1.msra.mxu0 0.0
    %114 = vmatprep.subr.mxu0 0.0
    %115 = vmatpush1.msra.mxu0 0.0
    %116 = vmatprep.subr.mxu0 0.0
    %117 = vmatpush1.msra.mxu0 0.0
    %118 = vmatprep.subr.mxu0 0.0
    %119 = vmatpush1.msra.mxu0 0.0
    %120 = vmatprep.subr.mxu0 0.0
    %121 = vmatpush1.msra.mxu0 0.0
    %122 = vmatprep.subr.mxu0 0.0
    %123 = vmatpush1.msra.mxu0 0.0
    %124 = vmatprep.subr.mxu0 0.0
    %125 = vmatpush1.msra.mxu0 0.0
    %126 = vmatprep.subr.mxu0 0.0
    %127 = vmatpush1.msra.mxu0 0.0
    %128 = vmatprep.subr.mxu0 0.0
    %129 = vmatpush1.msra.mxu0 0.0
    %130 = vmatprep.subr.mxu0 0.0
    %131 = vmatpush1.msra.mxu0 0.0
    %132 = vmatprep.subr.mxu0 0.0
    %133 = vmatpush1.msra.mxu0 0.0
    %134 = vmatprep.subr.mxu0 0.0
    %135 = vmatpush1.msra.mxu0 0.0
    %136 = vmatprep.subr.mxu0 0.0
    %137 = vmatpush1.msra.mxu0 0.0
    %138 = vmatprep.mubr.f32.mxu0 0.0
    %139 = vmatmul.mubr.f32.gmra.mrb[0].mxu0 %v72
    %v140 = vpop.f32.mrb[0].mxu0
    %v141 = vadd.f32 %v68, %v140
    %v142 = vpop.f32.mrb[0].mxu0
    %143 = vdwg.mxu0
    %v144 = vmax.f32 %v141, 0.0
    %v145 = vld [vmem:[#allocation7] sm:$0xff]
    %v146 = vld [vmem:[#allocation7 + $0x8] sm:$0xff]
    %v147 = vld [vmem:[#allocation7 + $0x10] sm:$0xff]
    %v148 = vld [vmem:[#allocation7 + $0x18] sm:$0xff]
    %v149 = vld [vmem:[%s4] sm:$0x1]
    %v151 = vlaneseq
    %v152 = vshrl.u32 %v151, 7
    %v153 = vsub.s32 0, %v152
    %v154 = vrot.slane %v149, %v153
    %vm156 = vcmask 261120
    %v158 = vsel %vm156, %v144, 0
    %160 = vmatprep.subr.mxu0 0.0
    %161 = vmatpush1.msra.mxu0 %v145
    %162 = vmatprep.subr.mxu0 0.0
    %163 = vmatpush1.msra.mxu0 %v146
    %164 = vmatprep.subr.mxu0 0.0
    %165 = vmatpush1.msra.mxu0 %v147
    %166 = vmatprep.subr.mxu0 0.0
    %167 = vmatpush1.msra.mxu0 %v148
    %168 = vmatprep.subr.mxu0 0.0
    %169 = vmatpush1.msra.mxu0 0.0
    %170 = vmatprep.subr.mxu0 0.0
    %171 = vmatpush1.msra.mxu0 0.0
    %172 = vmatprep.subr.mxu0 0.0
    %173 = vmatpush1.msra.mxu0 0.0
    %174 = vmatprep.subr.mxu0 0.0
    %175 = vmatpush1.msra.mxu0 0.0
    %176 = vmatprep.subr.mxu0 0.0
    %177 = vmatpush1.msra.mxu0 0.0
    %178 = vmatprep.subr.mxu0 0.0
    %179 = vmatpush1.msra.mxu0 0.0
    %180 = vmatprep.subr.mxu0 0.0
    %181 = vmatpush1.msra.mxu0 0.0
    %182 = vmatprep.subr.mxu0 0.0
    %183 = vmatpush1.msra.mxu0 0.0
    %184 = vmatprep.subr.mxu0 0.0
    %185 = vmatpush1.msra.mxu0 0.0
    %186 = vmatprep.subr.mxu0 0.0
    %187 = vmatpush1.msra.mxu0 0.0
    %188 = vmatprep.subr.mxu0 0.0
    %189 = vmatpush1.msra.mxu0 0.0
    %190 = vmatprep.subr.mxu0 0.0
    %191 = vmatpush1.msra.mxu0 0.0
    %192 = vmatprep.subr.mxu0 0.0
    %193 = vmatpush1.msra.mxu0 0.0
    %194 = vmatprep.subr.mxu0 0.0
    %195 = vmatpush1.msra.mxu0 0.0
    %196 = vmatprep.subr.mxu0 0.0
    %197 = vmatpush1.msra.mxu0 0.0
    %198 = vmatprep.subr.mxu0 0.0
    %199 = vmatpush1.msra.mxu0 0.0
    %200 = vmatprep.subr.mxu0 0.0
    %201 = vmatpush1.msra.mxu0 0.0
    %202 = vmatprep.subr.mxu0 0.0
    %203 = vmatpush1.msra.mxu0 0.0
    %204 = vmatprep.subr.mxu0 0.0
    %205 = vmatpush1.msra.mxu0 0.0
    %206 = vmatprep.subr.mxu0 0.0
    %207 = vmatpush1.msra.mxu0 0.0
    %208 = vmatprep.subr.mxu0 0.0
    %209 = vmatpush1.msra.mxu0 0.0
    %210 = vmatprep.subr.mxu0 0.0
    %211 = vmatpush1.msra.mxu0 0.0
    %212 = vmatprep.subr.mxu0 0.0
    %213 = vmatpush1.msra.mxu0 0.0
    %214 = vmatprep.subr.mxu0 0.0
    %215 = vmatpush1.msra.mxu0 0.0
    %216 = vmatprep.subr.mxu0 0.0
    %217 = vmatpush1.msra.mxu0 0.0
    %218 = vmatprep.subr.mxu0 0.0
    %219 = vmatpush1.msra.mxu0 0.0
    %220 = vmatprep.subr.mxu0 0.0
    %221 = vmatpush1.msra.mxu0 0.0
    %222 = vmatprep.subr.mxu0 0.0
    %223 = vmatpush1.msra.mxu0 0.0
    %224 = vmatprep.mubr.f32.mxu0 0.0
    %225 = vmatmul.mubr.f32.gmra.mrb[0].mxu0 %v158
    %v226 = vpop.f32.mrb[0].mxu0
    %v227 = vadd.f32 %v154, %v226
    %v228 = vpop.f32.mrb[0].mxu0
    %229 = vdwg.mxu0
    %v230 = vmax.f32 %v227, 0.0
    %231 = vst.msk [vmem:[#allocation8] sm:$0xff] %vm156, %v230
    // Predicated region
    $region34: #{tpu_custom_call.1} parent=1 // pred_check
      _
    $region35: #{tpu_custom_call.1} parent=1 // pred_check_branch
      %233 = sbr.rel (0) target = $region37
    $region36: #{tpu_custom_call.1} parent=1 // pred_region
      %s235 = ssub.s32 128, 128
      %236 = vsyncadd [#allocation4], %s235
      %s238 = sshll.u32 [#allocation8], 4
      %s239 = int_to_ptr.vmem [resolvable:$true] %s238
      %241 = dma.vmem_to_hbm [thread:$0]  %s239, 128, %s5, [#allocation4]
    $region37: #{tpu_custom_call.1} parent=1 // pred_fallthru
      _
    // Predicated region
    $region38: #{tpu_custom_call.1} parent=1 // pred_check
      _
    $region39: #{tpu_custom_call.1} parent=1 // pred_check_branch
      %243 = sbr.rel (0) target = $region41
    $region40: #{tpu_custom_call.1} parent=1 // pred_region
      %244 = dma.done [#allocation4], 128
    $region41: #{tpu_custom_call.1} parent=1 // pred_fallthru
      _
    %245 = vsyncpa [#allocation3], 1
    %246 = vsyncpa [#allocation6], 1
    %247 = vsyncpa [#allocation4], 1

</llo_original>
